<compile_context>
chip_gen: v7x
topology: tpu7x:2x2x1
jax: 0.10.0
libtpu: 0.0.40
codegen_flags: <defaults>
</compile_context>

<pallas_src>
import functools

import jax
import jax.numpy as jnp
from jax import lax
from jax.experimental import pallas as pl
from jax.experimental.pallas import tpu as pltpu

BN_EPS = 1e-5      # nn.BatchNorm2d default eps
AIAW_EPS = 1e-7    # Shader.eps (dead under the strictly-upper mask; kept for doc)


# ----------------------------------------------------------------------------
# Generation-aware VMEM budgets
# ----------------------------------------------------------------------------
def _tpu_vmem_capacity_bytes():
    try:
        info = pltpu.get_tpu_info()
        cap = int(getattr(info, "vmem_capacity_bytes", 0) or 0)
        if cap > 0:
            return cap
    except Exception:
        pass
    return 64 * 1024 * 1024          # conservative default (v7x per-TC VMEM)


_VMEM_CAP = _tpu_vmem_capacity_bytes()
# Leave headroom for compiler-internal scratch: ~48 MiB on v7x, ~96 MiB on v5e/v6e.
_VMEM_LIMIT = int(min(_VMEM_CAP * 3 // 4, 96 * 1024 * 1024))
# f32 conv accumulator budget: 8 MiB on 128-MiB parts, 4 MiB on v7x.
_ACC_BUDGET = int(min(_VMEM_CAP // 16, 8 * 1024 * 1024))


# ----------------------------------------------------------------------------
# Kernel 1: tiled 3x3 conv (stride 1, pad 1, no bias) + partial BN statistics
# ----------------------------------------------------------------------------
def _make_conv3x3_kernel(TH, W, C, H, Hp):
    """One (batch, row-tile) grid step over an overlapping padded-row window."""
    Wp = W + 2
    slab = TH * Wp
    mask_rows = (Hp != H)            # only needed when H was padded up to Hp

    def kernel(x_ref, w_ref, out_ref, stats_ref):
        # x_ref:     ((TH+3)*Wp, C) bf16  overlapping row window of padded image
        # w_ref:     (9, C, C)      bf16  conv taps, k = ky*3 + kx (resident)
        # out_ref:   (TH, W, C)     bf16  raw (pre-BN) conv output tile
        # stats_ref: (2, C)         f32   per-tile partial [sum, sum_of_squares]
        acc = jnp.zeros((slab, C), jnp.float32)
        for k in range(9):                       # static unroll: 9 fat MXU matmuls
            ky, kx = divmod(k, 3)
            start = ky * Wp + kx                 # static offset inside the window
            patch = x_ref[pl.ds(start, slab), :]
            acc = acc + jnp.dot(patch, w_ref[k],
                                preferred_element_type=jnp.float32)

        # NOTE: this reshape+slice may cost one tile-sized VMEM copy; it is
        # minor next to the 9 matmuls and keeps the output store lane-dense.
        valid = acc.reshape(TH, Wp, C)[:, :W, :]        # drop 2 junk columns
        if mask_rows:
            # rows >= H belong to the H -> Hp padding; zero them so they do not
            # pollute the BN statistics (they are sliced away after the affine).
            row0 = pl.program_id(1) * TH
            rows = row0 + lax.broadcasted_iota(jnp.int32, (TH, W), 0)
            valid = jnp.where((rows < H)[:, :, None], valid, 0.0)

        out_ref[...] = valid.astype(out_ref.dtype)
        stats_ref[0:1, :] = jnp.sum(valid, axis=(0, 1)).reshape(1, C)
        stats_ref[1:2, :] = jnp.sum(valid * valid, axis=(0, 1)).reshape(1, C)

    return kernel


def _bn_affine_kernel(x_ref, scale_ref, shift_ref, out_ref):
    """y = x * scale + shift (channel-last, lane-dense C, bf16 in/out)."""
    x = x_ref[...].astype(jnp.float32)
    out_ref[...] = (x * scale_ref[...] + shift_ref[...]).astype(out_ref.dtype)


def _pick_row_tile(H, W, C, acc_budget_bytes):
    """Row tile TH so the f32 accumulator (TH*(W+2), C) stays under budget.

    No divisibility requirement on H: H is padded up to a multiple of TH, so an
    awkward H never degrades to TH = 1.
    """
    max_rows = max(1, acc_budget_bytes // (4 * C * (W + 2)))
    th = min(H, max_rows)
    if th >= 8:
        th -= th % 8                 # sublane-friendly slab heights
    return max(th, 1)


def _pick_affine_rows(n_rows, target=2048):
    """Large lane-dense row block for the HBM-bound BN affine pass."""
    if n_rows <= target:
        return n_rows                # single block == full dim (always legal)
    r = target
    while r >= 512:
        if n_rows % r == 0:
            return r
        r -= 8
    return target                    # non-divisible grid; Pallas masks the tail


@jax.jit
def conv3x3_bn(x_nchw, w9_bf16, gamma, beta):
    """Conv2d(C, C, 3, stride=1, padding=1, bias=False) + BatchNorm2d (batch stats).

    Returns NCHW bfloat16 (intermediates kept bf16 to halve HBM traffic)."""
    B, C, H, W = x_nchw.shape
    TH = _pick_row_tile(H, W, C, _ACC_BUDGET)
    n_tiles = pl.cdiv(H, TH)
    Hp = n_tiles * TH
    Wp = W + 2
    WIN = (TH + 3) * Wp              # 1 halo row above, 2 below, +1 row so the
                                     # flattened tap slabs stay in bounds

    # NHWC bf16; zero halo: 1 top row, (Hp - H + 2) bottom rows, 1 column each side.
    x_nhwc = jnp.transpose(x_nchw, (0, 2, 3, 1)).astype(jnp.bfloat16)
    xpad = jnp.pad(x_nhwc, ((0, 0), (1, Hp - H + 2), (1, 1), (0, 0)))

    # Overlapping (TH+3)-row windows -> per-grid-step DMA is tile-sized (v7x-safe)
    # instead of double-buffering the whole padded image.
    row_idx = (jnp.arange(n_tiles)[:, None] * TH
               + jnp.arange(TH + 3)[None, :]).reshape(-1)
    xwin = jnp.take(xpad, row_idx, axis=1).reshape(B, n_tiles, WIN, C)

    conv_raw, stats = pl.pallas_call(
        _make_conv3x3_kernel(TH, W, C, H, Hp),
        grid=(B, n_tiles),
        in_specs=[
            pl.BlockSpec((None, None, WIN, C), lambda b, r: (b, r, 0, 0)),
            pl.BlockSpec((9, C, C), lambda b, r: (0, 0, 0)),   # resident weights
        ],
        out_specs=(
            pl.BlockSpec((None, TH, W, C), lambda b, r: (b, r, 0, 0)),
            pl.BlockSpec((None, 2, C), lambda b, r: (b * n_tiles + r, 0, 0)),
        ),
        out_shape=(
            jax.ShapeDtypeStruct((B, Hp, W, C), jnp.bfloat16),
            jax.ShapeDtypeStruct((B * n_tiles, 2, C), jnp.float32),
        ),
        compiler_params=pltpu.CompilerParams(
            dimension_semantics=("parallel", "parallel"),
            vmem_limit_bytes=_VMEM_LIMIT),
    )(xwin, w9_bf16)

    # BatchNorm2d batch statistics from f32 partial sums (padding rows/cols
    # contribute exactly zero, so n uses the true element count).
    n = float(B * H * W)
    s = jnp.sum(stats, axis=0)                         # (2, C)
    mean = s[0] / n
    var = jnp.maximum(s[1] / n - mean * mean, 0.0)     # biased variance
    inv = lax.rsqrt(var + BN_EPS)
    scale = (gamma * inv).reshape(1, C).astype(jnp.float32)
    shift = (beta - mean * gamma * inv).reshape(1, C).astype(jnp.float32)

    # Lane-dense bf16 affine pass over the flattened activation, decoupled from TH.
    N = B * Hp * W
    flat = conv_raw.reshape(N, C)
    AF_R = _pick_affine_rows(N)
    y_flat = pl.pallas_call(
        _bn_affine_kernel,
        grid=(pl.cdiv(N, AF_R),),
        in_specs=[
            pl.BlockSpec((AF_R, C), lambda i: (i, 0)),
            pl.BlockSpec((1, C), lambda i: (0, 0)),
            pl.BlockSpec((1, C), lambda i: (0, 0)),
        ],
        out_specs=pl.BlockSpec((AF_R, C), lambda i: (i, 0)),
        out_shape=jax.ShapeDtypeStruct((N, C), jnp.bfloat16),
        compiler_params=pltpu.CompilerParams(
            dimension_semantics=("parallel",),
            vmem_limit_bytes=_VMEM_LIMIT),
    )(flat, scale, shift)

    y = y_flat.reshape(B, Hp, W, C)
    if Hp != H:
        y = y[:, :H]
    return jnp.transpose(y, (0, 3, 1, 2))              # NCHW, bf16


# ----------------------------------------------------------------------------
# Kernel 2: AIAW pair-covariance off-diagonal variance (cal_covstat branch)
# ----------------------------------------------------------------------------
def _make_pair_cov_kernel(hw):
    denom = float(hw - 1)

    def kernel(org_ref, aug_ref, out_ref, acc_o_ref, acc_a_ref):
        """org_ref/aug_ref: (C, TK) bf16 chunk of one sample's flattened features.
           out_ref:  (C, C) f32 Var over the (org, aug) pair of masked covariances.
           acc_*_ref: (C, C) f32 VMEM Gram accumulators across the HW chunks."""
        k = pl.program_id(1)

        @pl.when(k == 0)
        def _():
            acc_o_ref[...] = jnp.zeros_like(acc_o_ref)
            acc_a_ref[...] = jnp.zeros_like(acc_a_ref)

        dn = (((1,), (1,)), ((), ()))     # X @ X.T without an XLU transpose
        o = org_ref[...]
        a = aug_ref[...]
        acc_o_ref[...] += lax.dot_general(o, o, dn,
                                          preferred_element_type=jnp.float32)
        acc_a_ref[...] += lax.dot_general(a, a, dn,
                                          preferred_element_type=jnp.float32)

        @pl.when(k == pl.num_programs(1) - 1)
        def _():
            C = out_ref.shape[0]
            r = lax.broadcasted_iota(jnp.int32, (C, C), 0)
            c = lax.broadcasted_iota(jnp.int32, (C, C), 1)
            upper = (r < c).astype(jnp.float32)   # strictly upper triangular mask
            # torch.var(dim=0, unbiased=True) over the 2-element pair == (a-b)^2/2;
            # the original eps*eye term is annihilated by the strictly-upper mask.
            diff = (acc_o_ref[...] - acc_a_ref[...]) * (upper * (1.0 / denom))
            out_ref[...] = 0.5 * diff * diff

    return kernel


def _pick_hw_chunk(hw):
    """Lane-dense chunk width (multiple of 128, >= 512 when HW allows)."""
    hw128 = ((hw + 127) // 128) * 128
    if hw128 <= 2048:
        return hw128, hw128
    return 2048, ((hw + 2047) // 2048) * 2048


@jax.jit
def pair_cov_var(org_flat, aug_flat):
    """Per-sample Var over the (org, aug) pair of masked Gram/(HW-1) matrices."""
    B, C, HW = org_flat.shape
    TK, HWp = _pick_hw_chunk(HW)
    if HWp != HW:                      # zero columns are inert for X @ X.T
        pad = ((0, 0), (0, 0), (0, HWp - HW))
        org_flat = jnp.pad(org_flat, pad)
        aug_flat = jnp.pad(aug_flat, pad)
    n_chunks = HWp // TK
    return pl.pallas_call(
        _make_pair_cov_kernel(HW),
        grid=(B, n_chunks),
        in_specs=[
            pl.BlockSpec((None, C, TK), lambda b, k: (b, 0, k)),
            pl.BlockSpec((None, C, TK), lambda b, k: (b, 0, k)),
        ],
        out_specs=pl.BlockSpec((None, C, C), lambda b, k: (b, 0, 0)),
        out_shape=jax.ShapeDtypeStruct((B, C, C), jnp.float32),
        scratch_shapes=[pltpu.VMEM((C, C), jnp.float32),
                        pltpu.VMEM((C, C), jnp.float32)],
        compiler_params=pltpu.CompilerParams(
            dimension_semantics=("parallel", "arbitrary"),
            vmem_limit_bytes=_VMEM_LIMIT),
    )(org_flat, aug_flat)


# ----------------------------------------------------------------------------
# Host-side state: CovMatrix_AIAW_{low,high}  (relax_denom == 0 path)
# ----------------------------------------------------------------------------
class CovMatrixAIAW:
    def __init__(self, dim, sensitive_rate):
        self.dim = dim
        self.sensitive_rate = sensitive_rate          # 3/1000 (low), 0.6/1000 (high)
        self.i = jnp.eye(dim, dtype=jnp.float32)
        self.reversal_i = jnp.triu(jnp.ones((dim, dim), jnp.float32), k=1)
        self.num_off_diagonal = jnp.sum(self.reversal_i)
        self.cov_matrix = None
        self.count_pair_cov = 0
        self.mask_matrix = None
        self.num_sensitive = 0

    def get_eye_matrix(self):
        return self.i, self.reversal_i

    def set_pair_covariance(self, pair_cov):
        self.cov_matrix = pair_cov if self.cov_matrix is None else self.cov_matrix + pair_cov
        self.count_pair_cov += 1

    def set_mask_matrix(self):
        self.cov_matrix = self.cov_matrix / self.count_pair_cov
        cov_flat = jnp.reshape(self.cov_matrix, (-1,))
        num_sensitive = int(self.sensitive_rate * cov_flat.shape[0])   # margin == 0 branch
        mask_flat = jnp.zeros((self.dim * self.dim,), jnp.float32)
        if num_sensitive > 0:
            _, idx = jax.lax.top_k(cov_flat, num_sensitive)
            mask_flat = mask_flat.at[idx].set(1.0)
        new_mask = mask_flat.reshape(self.dim, self.dim)
        if self.mask_matrix is not None:
            self.mask_matrix = (self.mask_matrix.astype(jnp.int32)
                                & new_mask.astype(jnp.int32)).astype(jnp.float32)
        else:
            self.mask_matrix = new_mask
        self.num_sensitive = jnp.sum(self.mask_matrix)

    def get_mask_matrix(self, mask=True):
        if self.mask_matrix is None:
            self.set_mask_matrix()
        return self.i, self.mask_matrix, 0, self.num_sensitive


# ----------------------------------------------------------------------------
# Shader (JAX / Pallas port)
# ----------------------------------------------------------------------------
class Shader:
    def __init__(self, dim=384, eps=1e-7, key=None):
        self.dim = dim
        self.eps = eps
        key = jax.random.PRNGKey(0) if key is None else key
        kw, kg = jax.random.split(key)
        # Conv2d(dim, dim, 3, bias=False) with kaiming_normal(a=0, mode='fan_in')
        fan_in = dim * 3 * 3
        std = (2.0 / fan_in) ** 0.5
        w_oihw = jax.random.normal(kw, (dim, dim, 3, 3), jnp.float32) * std
        # (Cout, Cin, kh, kw) -> (kh*kw, Cin, Cout), bf16 for full-rate MXU.
        self.w9 = jnp.transpose(w_oihw, (2, 3, 1, 0)).reshape(9, dim, dim).astype(jnp.bfloat16)
        # BatchNorm2d: weight ~ U(0.02, 1.0), bias = 0 (weights_init_kaiming)
        self.gamma = jax.random.uniform(kg, (dim,), jnp.float32, 0.02, 1.0)
        self.beta = jnp.zeros((dim,), jnp.float32)
        self.cov_matrix_layer_low = CovMatrixAIAW(dim, 3.0 / 1000.0)
        self.cov_matrix_layer_high = CovMatrixAIAW(dim, 0.6 / 1000.0)

    def _conv_final(self, x_nchw):
        return conv3x3_bn(x_nchw, self.w9, self.gamma, self.beta)

    def forward(self, org_input, aug_input, contrast_label,
                cal_covstat=False, apply_wt=True, is_training=True):
        B, C, H, W = org_input.shape

        if cal_covstat:
            # NOTE: the original computes conv_final here and immediately
            # overwrites it with the raw inputs; the covariance statistics use
            # the RAW inputs, which is what we reproduce (the dead conv is skipped).
            org_flat = org_input.reshape(B, C, H * W).astype(jnp.bfloat16)
            aug_flat = aug_input.reshape(B, C, H * W).astype(jnp.bfloat16)
            pair_vars = pair_cov_var(org_flat, aug_flat)
            all_low = all(label <= 20 for label in contrast_label)
            any_low = any(label <= 20 for label in contrast_label)
            min_label = min(contrast_label)
            for i in range(B):
                if all_low:
                    use_low = contrast_label[i] == min_label
                elif any_low:
                    use_low = contrast_label[i] <= 20
                else:
                    use_low = contrast_label[i] == min_label
                layer = self.cov_matrix_layer_low if use_low else self.cov_matrix_layer_high
                layer.set_pair_covariance(pair_vars[i])
            return 0

        if is_training:
            fea_x2_x2 = self._conv_final(org_input)
            fea_x2_x2_aug = self._conv_final(aug_input)
            lo_idx, hi_idx = [], []
            if all(label <= 20 for label in contrast_label):
                min_label = min(contrast_label)
                for i, lab in enumerate(contrast_label):
                    (lo_idx if lab == min_label else hi_idx).append(i)
            elif any(label <= 20 for label in contrast_label):
                for i, lab in enumerate(contrast_label):
                    (lo_idx if lab <= 20 else hi_idx).append(i)
            else:
                min_label = min(contrast_label)
                for i, lab in enumerate(contrast_label):
                    (lo_idx if lab == min_label else hi_idx).append(i)
            lo = jnp.asarray(lo_idx, dtype=jnp.int32)
            hi = jnp.asarray(hi_idx, dtype=jnp.int32)
            fea_org_low = jnp.take(fea_x2_x2, lo, axis=0)
            fea_aug_low = jnp.take(fea_x2_x2_aug, lo, axis=0)
            fea_org_high = jnp.take(fea_x2_x2, hi, axis=0)
            fea_aug_high = jnp.take(fea_x2_x2_aug, hi, axis=0)
            if apply_wt:
                eye_low, mask_low, margin_low, num_low = \
                    self.cov_matrix_layer_low.get_mask_matrix()
                eye_high, mask_high, margin_high, num_high = \
                    self.cov_matrix_layer_high.get_mask_matrix()
        else:
            fea_x2_x2 = org_input

        outputs = {'out_feat': fea_x2_x2}
        if is_training and apply_wt:
            outputs['org_feat_low'] = fea_org_low
            outputs['org_feat_high'] = fea_org_high
            outputs['aug_feat_low'] = fea_aug_low
            outputs['aug_feat_high'] = fea_aug_high
            outputs['eye_low'] = eye_low
            outputs['eye_high'] = eye_high
            outputs['mask_matrix_low'] = mask_low
            outputs['mask_matrix_high'] = mask_high
            outputs['margin_low'] = margin_low
            outputs['margin_high'] = margin_high
            outputs['num_remove_cov_low'] = num_low
            outputs['num_remove_cov_high'] = num_high
        return outputs


if __name__ == "__main__":
    key = jax.random.PRNGKey(0)
    k1, k2, k3 = jax.random.split(key, 3)
    B, C, H, W = 2, 32, 8, 8
    org = jax.random.normal(k1, (B, C, H, W), jnp.float32)
    aug = org + 0.1 * jax.random.normal(k2, (B, C, H, W), jnp.float32)
    contrast_label = [5, 30]          # one "low" sample, one "high" sample

    shader = Shader(dim=C, eps=AIAW_EPS, key=k3)

    # Pass 1: accumulate AIAW covariance statistics (cal_covstat branch).
    shader.forward(org, aug, contrast_label, cal_covstat=True)

    # Pass 2: training forward (tiled Pallas conv3x3 + BN + whitening masks).
    out = shader.forward(org, aug, contrast_label,
                         cal_covstat=False, apply_wt=True, is_training=True)

    jax.block_until_ready(out['out_feat'])
    jax.block_until_ready(out['org_feat_low'])
    jax.block_until_ready(out['mask_matrix_low'])
    jax.block_until_ready(out['mask_matrix_high'])
    print("KERNEL_OK")
</pallas_src>

<mosaic_0001>
module attributes {stable_mosaic.version = 11 : i64} {
  func.func @kernel(%arg0: i32, %arg1: i32, %arg2: memref<1x32x128xbf16, #tpu.memory_space<vmem>>, %arg3: memref<1x32x128xbf16, #tpu.memory_space<vmem>>, %arg4: memref<1x32x32xf32, #tpu.memory_space<vmem>>, %arg5: memref<32x32xf32, #tpu.memory_space<vmem>>, %arg6: memref<32x32xf32, #tpu.memory_space<vmem>>) attributes {dimension_semantics = [#tpu.dimension_semantics<parallel>, #tpu.dimension_semantics<arbitrary>], iteration_bounds = array<i64: 2, 1>, scalar_prefetch = 0 : i64, scratch_operands = 2 : i64, tpu.core_type = #tpu.core_type<tc>, window_params = [{transform_indices = @transform_0, window_bounds = array<i64: 1, 32, 128>}, {transform_indices = @transform_1, window_bounds = array<i64: 1, 32, 128>}, {transform_indices = @transform_2, window_bounds = array<i64: 1, 32, 32>}]} {
    %c0_i32 = arith.constant 0 : i32
    %0 = arith.cmpi eq, %arg1, %c0_i32 : i32
    %1 = arith.extui %0 : i1 to i32
    %c0_i32_0 = arith.constant 0 : i32
    %2 = arith.cmpi ne, %1, %c0_i32_0 : i32
    scf.if %2 {
      %cst_17 = arith.constant 0.000000e+00 : f32
      %18 = vector.broadcast %cst_17 : f32 to vector<32x32xf32>
      %c0_18 = arith.constant 0 : index
      %c0_19 = arith.constant 0 : index
      %19 = vector.load %arg5[%c0_18, %c0_19] : memref<32x32xf32, #tpu.memory_space<vmem>>, vector<32x32xf32>
      tpu.vector_store %arg5[%c0_18, %c0_19], %18 {strides = array<i32>} : memref<32x32xf32, #tpu.memory_space<vmem>>, vector<32x32xf32>,
      %cst_20 = arith.constant 0.000000e+00 : f32
      %20 = vector.broadcast %cst_20 : f32 to vector<32x32xf32>
      %c0_21 = arith.constant 0 : index
      %c0_22 = arith.constant 0 : index
      %21 = vector.load %arg6[%c0_21, %c0_22] : memref<32x32xf32, #tpu.memory_space<vmem>>, vector<32x32xf32>
      tpu.vector_store %arg6[%c0_21, %c0_22], %20 {strides = array<i32>} : memref<32x32xf32, #tpu.memory_space<vmem>>, vector<32x32xf32>,
    } else {
    }
    %c0 = arith.constant 0 : index
    %c0_1 = arith.constant 0 : index
    %c0_2 = arith.constant 0 : index
    %3 = vector.load %arg2[%c0, %c0_1, %c0_2] : memref<1x32x128xbf16, #tpu.memory_space<vmem>>, vector<1x32x128xbf16>
    %4 = vector.shape_cast %3 : vector<1x32x128xbf16> to vector<32x128xbf16>
    %c0_3 = arith.constant 0 : index
    %c0_4 = arith.constant 0 : index
    %c0_5 = arith.constant 0 : index
    %5 = vector.load %arg3[%c0_3, %c0_4, %c0_5] : memref<1x32x128xbf16, #tpu.memory_space<vmem>>, vector<1x32x128xbf16>
    %6 = vector.shape_cast %5 : vector<1x32x128xbf16> to vector<32x128xbf16>
    %c0_6 = arith.constant 0 : index
    %c0_7 = arith.constant 0 : index
    %7 = vector.load %arg5[%c0_6, %c0_7] : memref<32x32xf32, #tpu.memory_space<vmem>>, vector<32x32xf32>
    %cst = arith.constant dense<0.000000e+00> : vector<32x32xf32>
    %8 = tpu.matmul %4, %4, %cst {dimension_numbers = #tpu.dot_dimension_numbers<[1], [1], [0], [0], [0, 0, 1, 0], [], []>} : vector<32x128xbf16>, vector<32x128xbf16>, vector<32x32xf32> -> vector<32x32xf32>
    %9 = arith.addf %7, %8 : vector<32x32xf32>
    %c0_8 = arith.constant 0 : index
    %c0_9 = arith.constant 0 : index
    %10 = vector.load %arg5[%c0_8, %c0_9] : memref<32x32xf32, #tpu.memory_space<vmem>>, vector<32x32xf32>
    tpu.vector_store %arg5[%c0_8, %c0_9], %9 {strides = array<i32>} : memref<32x32xf32, #tpu.memory_space<vmem>>, vector<32x32xf32>,
    %c0_10 = arith.constant 0 : index
    %c0_11 = arith.constant 0 : index
    %11 = vector.load %arg6[%c0_10, %c0_11] : memref<32x32xf32, #tpu.memory_space<vmem>>, vector<32x32xf32>
    %cst_12 = arith.constant dense<0.000000e+00> : vector<32x32xf32>
    %12 = tpu.matmul %6, %6, %cst_12 {dimension_numbers = #tpu.dot_dimension_numbers<[1], [1], [0], [0], [0, 0, 1, 0], [], []>} : vector<32x128xbf16>, vector<32x128xbf16>, vector<32x32xf32> -> vector<32x32xf32>
    %13 = arith.addf %11, %12 : vector<32x32xf32>
    %c0_13 = arith.constant 0 : index
    %c0_14 = arith.constant 0 : index
    %14 = vector.load %arg6[%c0_13, %c0_14] : memref<32x32xf32, #tpu.memory_space<vmem>>, vector<32x32xf32>
    tpu.vector_store %arg6[%c0_13, %c0_14], %13 {strides = array<i32>} : memref<32x32xf32, #tpu.memory_space<vmem>>, vector<32x32xf32>,
    %c0_i32_15 = arith.constant 0 : i32
    %15 = arith.cmpi eq, %arg1, %c0_i32_15 : i32
    %16 = arith.extui %15 : i1 to i32
    %c0_i32_16 = arith.constant 0 : i32
    %17 = arith.cmpi ne, %16, %c0_i32_16 : i32
    scf.if %17 {
      %18 = tpu.iota {dimensions = array<i32: 0>} : vector<32x32xi32>
      %19 = tpu.iota {dimensions = array<i32: 1>} : vector<32x32xi32>
      %20 = arith.cmpi slt, %18, %19 : vector<32x32xi32>
      %21 = arith.extui %20 : vector<32x32xi1> to vector<32x32xi32>
      %22 = arith.sitofp %21 : vector<32x32xi32> to vector<32x32xf32>
      %c0_17 = arith.constant 0 : index
      %c0_18 = arith.constant 0 : index
      %23 = vector.load %arg5[%c0_17, %c0_18] : memref<32x32xf32, #tpu.memory_space<vmem>>, vector<32x32xf32>
      %c0_19 = arith.constant 0 : index
      %c0_20 = arith.constant 0 : index
      %24 = vector.load %arg6[%c0_19, %c0_20] : memref<32x32xf32, #tpu.memory_space<vmem>>, vector<32x32xf32>
      %25 = arith.subf %23, %24 : vector<32x32xf32>
      %cst_21 = arith.constant 0.0158730168 : f32
      %26 = vector.broadcast %cst_21 : f32 to vector<32x32xf32>
      %27 = arith.mulf %22, %26 : vector<32x32xf32>
      %28 = arith.mulf %25, %27 : vector<32x32xf32>
      %cst_22 = arith.constant 5.000000e-01 : f32
      %29 = vector.broadcast %cst_22 : f32 to vector<32x32xf32>
      %30 = arith.mulf %29, %28 : vector<32x32xf32>
      %31 = arith.mulf %30, %28 : vector<32x32xf32>
      %c0_23 = arith.constant 0 : index
      %c0_24 = arith.constant 0 : index
      %c0_25 = arith.constant 0 : index
      %32 = vector.load %arg4[%c0_23, %c0_24, %c0_25] : memref<1x32x32xf32, #tpu.memory_space<vmem>>, vector<1x32x32xf32>
      %33 = vector.shape_cast %32 : vector<1x32x32xf32> to vector<32x32xf32>
      %34 = vector.shape_cast %31 : vector<32x32xf32> to vector<1x32x32xf32>
      tpu.vector_store %arg4[%c0_23, %c0_24, %c0_25], %34 {strides = array<i32>} : memref<1x32x32xf32, #tpu.memory_space<vmem>>, vector<1x32x32xf32>,
    } else {
    }
    return
  }
  func.func @transform_0(%arg0: i32, %arg1: i32) -> (i32, i32, i32) {
    %c0_i32 = arith.constant 0 : i32
    %c0_i32_0 = arith.constant 0 : i32
    return %arg0, %c0_i32, %arg1 : i32, i32, i32
  }
  func.func @transform_1(%arg0: i32, %arg1: i32) -> (i32, i32, i32) {
    %c0_i32 = arith.constant 0 : i32
    %c0_i32_0 = arith.constant 0 : i32
    return %arg0, %c0_i32, %arg1 : i32, i32, i32
  }
  func.func @transform_2(%arg0: i32, %arg1: i32) -> (i32, i32, i32) {
    %c0_i32 = arith.constant 0 : i32
    %c0_i32_0 = arith.constant 0 : i32
    %c0_i32_1 = arith.constant 0 : i32
    return %arg0, %c0_i32, %c0_i32_0 : i32, i32, i32
  }
}

</mosaic_0001>

<llo_original>
// kernel: pair_cov_var.1
$region0: #{pair_cov_var.1}
  #allocation0 [shape = 'u32[]', space=smem, size = 0x4, offset = 0x4, fixed_abs, tag = 'smem constant byte address 0x4 - core index']
  #allocation1 [shape = 'u32[144,128]{1,0:T(1,128)}', space=vmem, size = 0x12000, scoped, tag = 'internal scratch']
  #allocation2 [shape = 'f32[32,32]{1,0:T(8,128)}', space=vmem, size = 0x4000, scoped, tag = 'scratch operand']
  #allocation3 [shape = 'f32[32,32]{1,0:T(8,128)}', space=vmem, size = 0x4000, scoped, tag = 'scratch operand']
  %s0 = inlined_call_operand.vmem [shape: bf16[2,32,128], index: 0, kind: input, shape index: {}]
  %s1 = inlined_call_operand.vmem [shape: bf16[2,32,128], index: 1, kind: input, shape index: {}]
  %s2 = inlined_call_operand.hbm [shape: f32[2,32,32], index: 2, kind: output, shape index: {}]
  %s3 = sld [smem:[#allocation0]]
  $region49: #{pair_cov_var.1} parent=0
    _
  %s5 = ssub.s32 1, %s3
  %s6 = scalar_select 0, %s5, %s3
  $region1: #{pair_cov_var.1} parent=0
    #allocation4 [shape = 'u8[32768]{0}', space=vmem, size = 0x8000, scoped, tag = 'output window, operand 0']
    #allocation5 [shape = 's32[2]{0}', space=sflag, size = 0x8, scoped, tag = 'scoped memory for pair_cov_var.1']
    %7 = vsyncpa [#allocation5], 0
    %s8 = scalar_lea.sflag [#allocation5], 1
    %9 = vsyncpa %s8, 0
    loop: start=0, step=1, limit=4
    $region2: #{pair_cov_var.1} parent=1 // loop_pre_header
      _
    $region3: #{pair_cov_var.1} parent=1 // loop_header
      %s11 = sphi 0, %s15
      %p12 = scmp.ge.s32.totalorder %s11, 4
      %s18 = sphi 0, %s30
      %s19 = sphi 0, %s26
      %s20 = sphi 0, %s18
      %s21 = sphi 0, %s19
      %s22 = sphi 0, %s20
      %s23 = sphi 0, %s21
      %s35 = sphi 0, %s37
      %s38 = sphi 0, %s35
      %s39 = sphi 0, %s38
      %s55 = sphi 0, %s39
      %s63 = sphi 0, %s65
      %s66 = sphi 0, %s63
      %s67 = sphi 0, %s66
      %s83 = sphi 0, %s67
      %s89 = sphi 0, %s91
      %s92 = sphi 0, %s89
      %s93 = sphi 0, %s92
      %s109 = sphi 0, %s93
    $region4: #{pair_cov_var.1} parent=1 // loop_header_branch
      %14 = sbr.rel (%p12) target = $region8
    $region5: #{pair_cov_var.1} parent=1 // loop_body
      %s16 = ssub.s32 %s11, 1
      %s17 = ssub.s32 %s11, 2
      %s24 = sadd.s32 1, %s19
      %p25 = scmp.ge.s32.totalorder %s24, 1
      %s26 = scalar_select %p25, 0, %s24
      %s27 = sadd.s32 1, %s18
      %s28 = scalar_select %p25, %s27, %s18
      %p29 = scmp.ge.s32.totalorder %s28, 2
      %s30 = scalar_select %p29, 0, %s28
      %s31 = ssub.s32 %s18, %s30
      %s32 = ssub.s32 %s19, %s26
      %s33 = sor.u32 %s31, %s32
      %p34 = scmp.eq.s32.totalorder %s33, 0
      %s36 = sadd.s32 %s35, 1
      %s37 = scalar_select %p34, %s35, %s36
      %p40 = pneg %p34
      %p41 = scmp.eq.s32.totalorder %s11, 1
      %p42 = por %p40, %p41
      %p43 = scmp.ne.s32.totalorder %s35, %s38
      %p44 = scmp.eq.s32.totalorder %s11, 0
      %p45 = por %p43, %p44
      %p46 = scmp.ne.s32.totalorder %s35, %s38
      %p47 = scmp.eq.s32.totalorder %s16, 1
      %p48 = por %p46, %p47
      %p49 = scmp.ne.s32.totalorder %s38, %s39
      %p50 = scmp.eq.s32.totalorder %s16, 0
      %p51 = por %p49, %p50
      %p52 = scmp.ne.s32.totalorder %s38, %s39
      %p53 = scmp.eq.s32.totalorder %s17, 1
      %p54 = por %p52, %p53
      %p56 = scmp.ne.s32.totalorder %s39, %s55
      %p57 = scmp.eq.s32.totalorder %s17, 0
      %p58 = por %p56, %p57
      %s59 = ssub.s32 %s18, %s30
      %s60 = ssub.s32 %s19, %s26
      %s61 = sor.u32 %s59, %s60
      %p62 = scmp.eq.s32.totalorder %s61, 0
      %s64 = sadd.s32 %s63, 1
      %s65 = scalar_select %p62, %s63, %s64
      %p68 = pneg %p62
      %p69 = scmp.eq.s32.totalorder %s11, 1
      %p70 = por %p68, %p69
      %p71 = scmp.ne.s32.totalorder %s63, %s66
      %p72 = scmp.eq.s32.totalorder %s11, 0
      %p73 = por %p71, %p72
      %p74 = scmp.ne.s32.totalorder %s63, %s66
      %p75 = scmp.eq.s32.totalorder %s16, 1
      %p76 = por %p74, %p75
      %p77 = scmp.ne.s32.totalorder %s66, %s67
      %p78 = scmp.eq.s32.totalorder %s16, 0
      %p79 = por %p77, %p78
      %p80 = scmp.ne.s32.totalorder %s66, %s67
      %p81 = scmp.eq.s32.totalorder %s17, 1
      %p82 = por %p80, %p81
      %p84 = scmp.ne.s32.totalorder %s67, %s83
      %p85 = scmp.eq.s32.totalorder %s17, 0
      %p86 = por %p84, %p85
      %s87 = ssub.s32 %s18, %s30
      %p88 = scmp.eq.s32.totalorder %s87, 0
      %s90 = sadd.s32 %s89, 1
      %s91 = scalar_select %p88, %s89, %s90
      %p94 = pneg %p88
      %p95 = scmp.eq.s32.totalorder %s11, 1
      %p96 = por %p94, %p95
      %p97 = scmp.ne.s32.totalorder %s89, %s92
      %p98 = scmp.eq.s32.totalorder %s11, 0
      %p99 = por %p97, %p98
      %p100 = scmp.ne.s32.totalorder %s89, %s92
      %p101 = scmp.eq.s32.totalorder %s16, 1
      %p102 = por %p100, %p101
      %p103 = scmp.ne.s32.totalorder %s92, %s93
      %p104 = scmp.eq.s32.totalorder %s16, 0
      %p105 = por %p103, %p104
      %p106 = scmp.ne.s32.totalorder %s92, %s93
      %p107 = scmp.eq.s32.totalorder %s17, 1
      %p108 = por %p106, %p107
      %p110 = scmp.ne.s32.totalorder %s93, %s109
      %p111 = scmp.eq.s32.totalorder %s17, 0
      %p112 = por %p110, %p111
      %p113 = scmp.le.s32.totalorder 1, %s11
      %p114 = scmp.lt.s32.totalorder %s11, 3
      %p115 = pnand %p113, %p114
      %p116 = pneg %p115
      // Predicated region
      $region9: #{pair_cov_var.1} parent=5 // pred_check
        _
      $region10: #{pair_cov_var.1} parent=5 // pred_check_branch
        %118 = sbr.rel (%p115) target = $region12
      $region11: #{pair_cov_var.1} parent=5 // pred_region
        %s119 = ssub.s32 %s11, 1
      $region12: #{pair_cov_var.1} parent=5 // pred_fallthru
        _
      %p120 = scmp.lt.s32.totalorder %s11, 2
      // Predicated region
      $region13: #{pair_cov_var.1} parent=5 // pred_check
        %p121 = pneg %p120
      $region14: #{pair_cov_var.1} parent=5 // pred_check_branch
        %123 = sbr.rel (%p121) target = $region16
      $region15: #{pair_cov_var.1} parent=5 // pred_region
        // Predicated region
        $region17: #{pair_cov_var.1} parent=15 // pred_check
          %p124 = pneg %p45
        $region18: #{pair_cov_var.1} parent=15 // pred_check_branch
          %126 = sbr.rel (%p124) target = $region20
        $region19: #{pair_cov_var.1} parent=15 // pred_region
          %p127 = scmp.lt.s32.totalorder %s18, 1
          %s128 = scalar_select %p127, %s18, 1
          %p129 = scmp.lt.s32.totalorder %s19, 0
          %s130 = scalar_select %p129, %s19, 0
          %s131 = smul.addr %s128, 4
          %s132 = sadd.s32 %s130, %s131
          %s133 = smul.addr %s132, 4
          %s134 = scalar_lea.vmem %s0, %s133
        $region20: #{pair_cov_var.1} parent=15 // pred_fallthru
          _
        // Predicated region
        $region21: #{pair_cov_var.1} parent=15 // pred_check
          %p135 = pneg %p73
        $region22: #{pair_cov_var.1} parent=15 // pred_check_branch
          %137 = sbr.rel (%p135) target = $region24
        $region23: #{pair_cov_var.1} parent=15 // pred_region
          %p138 = scmp.lt.s32.totalorder %s18, 1
          %s139 = scalar_select %p138, %s18, 1
          %p140 = scmp.lt.s32.totalorder %s19, 0
          %s141 = scalar_select %p140, %s19, 0
          %s142 = smul.addr %s139, 4
          %s143 = sadd.s32 %s141, %s142
          %s144 = smul.addr %s143, 4
          %s145 = scalar_lea.vmem %s1, %s144
        $region24: #{pair_cov_var.1} parent=15 // pred_fallthru
          _
      $region16: #{pair_cov_var.1} parent=5 // pred_fallthru
        _
      %p146 = scmp.le.s32.totalorder 1, %s11
      %p147 = scmp.lt.s32.totalorder %s11, 3
      %p148 = pnand %p146, %p147
      %p149 = pneg %p148
      // Predicated region
      $region25: #{pair_cov_var.1} parent=5 // pred_check
        _
      $region26: #{pair_cov_var.1} parent=5 // pred_check_branch
        %151 = sbr.rel (%p148) target = $region28
      $region27: #{pair_cov_var.1} parent=5 // pred_region
        %s152 = ssub.s32 %s11, 1
        %p153 = scmp.lt.s32.totalorder %s20, 1
        %s154 = scalar_select %p153, %s20, 1
        %p155 = scmp.lt.s32.totalorder %s21, 0
        %s156 = scalar_select %p155, %s21, 0
        %s157 = smul.addr %s154, 4
        %s158 = sadd.s32 %s156, %s157
        %s159 = smul.addr %s158, 4
        %s160 = scalar_lea.vmem %s0, %s159
        %p161 = pneg %p51
        %p162 = pneg %p48
        %p163 = scmp.lt.s32.totalorder %s20, 1
        %s164 = scalar_select %p163, %s20, 1
        %p165 = scmp.lt.s32.totalorder %s21, 0
        %s166 = scalar_select %p165, %s21, 0
        %s167 = smul.addr %s164, 4
        %s168 = sadd.s32 %s166, %s167
        %s169 = smul.addr %s168, 4
        %s170 = scalar_lea.vmem %s1, %s169
        %p171 = pneg %p79
        %p172 = pneg %p76
        %p173 = pneg %p105
        %p174 = pneg %p102
        %s175 = sand.u32 %s92, 1
        %s176 = scalar_lea.sflag [#allocation5], %s175
        %s177 = sand.u32 %s92, 1
        %s178 = smul.addr %s177, 32
        %s179 = scalar_lea.vmem [#allocation4], %s178
        %p180 = scmp.lt.s32.totalorder %s20, 1
        %s181 = scalar_select %p180, %s20, 1
        %p182 = scmp.lt.s32.totalorder %s21, 0
        %s183 = scalar_select %p182, %s21, 0
        %s184 = smul.addr %s181, 4
        %s185 = sadd.s32 %s183, %s184
        %s186 = smul.addr %s185, 4
        %s187 = scalar_lea.vmem %s0, %s186
        %p188 = scmp.lt.s32.totalorder %s20, 1
        %s189 = scalar_select %p188, %s20, 1
        %p190 = scmp.lt.s32.totalorder %s21, 0
        %s191 = scalar_select %p190, %s21, 0
        %s192 = smul.addr %s189, 4
        %s193 = sadd.s32 %s191, %s192
        %s194 = smul.addr %s193, 4
        %s195 = scalar_lea.vmem %s1, %s194
        %p197 = scmp.eq.s32.totalorder %s21, 0
        // Predicated region
        $region29: #{pair_cov_var.1} parent=27 // pred_check
          %p198 = pneg %p197
        $region30: #{pair_cov_var.1} parent=27 // pred_check_branch
          %200 = sbr.rel (%p198) target = $region32
        $region31: #{pair_cov_var.1} parent=27 // pred_region
          %vm201 = vcmask 261120
          %202 = vst.msk [vmem:[#allocation2] sm:$0xff] %vm201, 0.0
          %203 = vst.msk [vmem:[#allocation2 + $0x8] sm:$0xff] %vm201, 0.0
          %204 = vst.msk [vmem:[#allocation2 + $0x10] sm:$0xff] %vm201, 0.0
          %205 = vst.msk [vmem:[#allocation2 + $0x18] sm:$0xff] %vm201, 0.0
          %206 = vst.msk [vmem:[#allocation3] sm:$0xff] %vm201, 0.0
          %207 = vst.msk [vmem:[#allocation3 + $0x8] sm:$0xff] %vm201, 0.0
          %208 = vst.msk [vmem:[#allocation3 + $0x10] sm:$0xff] %vm201, 0.0
          %209 = vst.msk [vmem:[#allocation3 + $0x18] sm:$0xff] %vm201, 0.0
        $region32: #{pair_cov_var.1} parent=27 // pred_fallthru
          _
        %v210 = vld [vmem:[%s187] sm:$0xf]
        %v211 = vld [vmem:[%s187 + $0x4] sm:$0xf]
        %v212 = vld [vmem:[%s187 + $0x8] sm:$0xf]
        %v213 = vld [vmem:[%s187 + $0xc] sm:$0xf]
        %v214 = vld [vmem:[%s195] sm:$0xf]
        %v215 = vld [vmem:[%s195 + $0x4] sm:$0xf]
        %v216 = vld [vmem:[%s195 + $0x8] sm:$0xf]
        %v217 = vld [vmem:[%s195 + $0xc] sm:$0xf]
        %v218 = vld [vmem:[#allocation2] sm:$0xff]
        %v219 = vld [vmem:[#allocation2 + $0x8] sm:$0xff]
        %v220 = vld [vmem:[#allocation2 + $0x10] sm:$0xff]
        %v221 = vld [vmem:[#allocation2 + $0x18] sm:$0xff]
        %v226 = vunpack.c.l.b16 %v210
        %v227 = vunpack.c.l.b16 %v211
        %v228 = vunpack.c.l.b16 %v212
        %v229 = vunpack.c.l.b16 %v213
        %v230 = vpack.c.b16 %v227, %v226
        %v231 = vpack.c.b16 %v229, %v228
        %234 = vmatprep.subr.bf16.mxu0 0
        %235 = vmatpush1.bf16.xpose.msra.mxu0 %v230
        %236 = vmatprep.subr.bf16.mxu0 0
        %237 = vmatpush1.bf16.xpose.msra.mxu0 %v231
        %238 = vmatprep.subr.bf16.mxu0 0
        %239 = vmatpush1.bf16.xpose.msra.mxu0 0
        %240 = vmatprep.subr.bf16.mxu0 0
        %241 = vmatpush1.bf16.xpose.msra.mxu0 0
        %242 = vmatprep.subr.bf16.mxu0 0
        %243 = vmatpush1.bf16.xpose.msra.mxu0 0
        %244 = vmatprep.subr.bf16.mxu0 0
        %245 = vmatpush1.bf16.xpose.msra.mxu0 0
        %246 = vmatprep.subr.bf16.mxu0 0
        %247 = vmatpush1.bf16.xpose.msra.mxu0 0
        %248 = vmatprep.subr.bf16.mxu0 0
        %249 = vmatpush1.bf16.xpose.msra.mxu0 0
        %250 = vmatprep.subr.bf16.mxu0 0
        %251 = vmatpush1.bf16.xpose.msra.mxu0 0
        %252 = vmatprep.subr.bf16.mxu0 0
        %253 = vmatpush1.bf16.xpose.msra.mxu0 0
        %254 = vmatprep.subr.bf16.mxu0 0
        %255 = vmatpush1.bf16.xpose.msra.mxu0 0
        %256 = vmatprep.subr.bf16.mxu0 0
        %257 = vmatpush1.bf16.xpose.msra.mxu0 0
        %258 = vmatprep.subr.bf16.mxu0 0
        %259 = vmatpush1.bf16.xpose.msra.mxu0 0
        %260 = vmatprep.subr.bf16.mxu0 0
        %261 = vmatpush1.bf16.xpose.msra.mxu0 0
        %262 = vmatprep.subr.bf16.mxu0 0
        %263 = vmatpush1.bf16.xpose.msra.mxu0 0
        %264 = vmatprep.subr.bf16.mxu0 0
        %265 = vmatpush1.bf16.xpose.msra.mxu0 0
        %266 = vmatprep.mubr.bf16.mxu0 0
        %267 = vmatmul.mubr.bf16.gmra.mrb[0].mxu0 %v230
        %v268 = vpop.f32.mrb[0].mxu0
        %v269 = vadd.f32 0.0, %v268
        %v270 = vpop.f32.mrb[0].mxu0
        %v271 = vpop.f32.mrb[0].mxu0
        %v272 = vadd.f32 0.0, %v271
        %v273 = vpop.f32.mrb[0].mxu0
        %274 = vmatprep.mubr.bf16.mxu0 0
        %275 = vmatmul.mubr.bf16.gmra.mrb[0].mxu0 %v231
        %v276 = vpop.f32.mrb[0].mxu0
        %v277 = vadd.f32 0.0, %v276
        %v278 = vpop.f32.mrb[0].mxu0
        %v279 = vpop.f32.mrb[0].mxu0
        %v280 = vadd.f32 0.0, %v279
        %v281 = vpop.f32.mrb[0].mxu0
        %282 = vdwg.mxu0
        %v283 = vadd.f32 %v218, %v269
        %v284 = vadd.f32 %v219, %v272
        %v285 = vadd.f32 %v220, %v277
        %v286 = vadd.f32 %v221, %v280
        %vm287 = vcmask 261120
        %288 = vst.msk [vmem:[#allocation2] sm:$0xff] %vm287, %v283
        %289 = vst.msk [vmem:[#allocation2 + $0x8] sm:$0xff] %vm287, %v284
        %290 = vst.msk [vmem:[#allocation2 + $0x10] sm:$0xff] %vm287, %v285
        %291 = vst.msk [vmem:[#allocation2 + $0x18] sm:$0xff] %vm287, %v286
        %v292 = vld [vmem:[#allocation3] sm:$0xff]
        %v293 = vld [vmem:[#allocation3 + $0x8] sm:$0xff]
        %v294 = vld [vmem:[#allocation3 + $0x10] sm:$0xff]
        %v295 = vld [vmem:[#allocation3 + $0x18] sm:$0xff]
        %v300 = vunpack.c.l.b16 %v214
        %v301 = vunpack.c.l.b16 %v215
        %v302 = vunpack.c.l.b16 %v216
        %v303 = vunpack.c.l.b16 %v217
        %v304 = vpack.c.b16 %v301, %v300
        %v305 = vpack.c.b16 %v303, %v302
        %308 = vmatprep.subr.bf16.mxu0 0
        %309 = vmatpush1.bf16.xpose.msra.mxu0 %v304
        %310 = vmatprep.subr.bf16.mxu0 0
        %311 = vmatpush1.bf16.xpose.msra.mxu0 %v305
        %312 = vmatprep.subr.bf16.mxu0 0
        %313 = vmatpush1.bf16.xpose.msra.mxu0 0
        %314 = vmatprep.subr.bf16.mxu0 0
        %315 = vmatpush1.bf16.xpose.msra.mxu0 0
        %316 = vmatprep.subr.bf16.mxu0 0
        %317 = vmatpush1.bf16.xpose.msra.mxu0 0
        %318 = vmatprep.subr.bf16.mxu0 0
        %319 = vmatpush1.bf16.xpose.msra.mxu0 0
        %320 = vmatprep.subr.bf16.mxu0 0
        %321 = vmatpush1.bf16.xpose.msra.mxu0 0
        %322 = vmatprep.subr.bf16.mxu0 0
        %323 = vmatpush1.bf16.xpose.msra.mxu0 0
        %324 = vmatprep.subr.bf16.mxu0 0
        %325 = vmatpush1.bf16.xpose.msra.mxu0 0
        %326 = vmatprep.subr.bf16.mxu0 0
        %327 = vmatpush1.bf16.xpose.msra.mxu0 0
        %328 = vmatprep.subr.bf16.mxu0 0
        %329 = vmatpush1.bf16.xpose.msra.mxu0 0
        %330 = vmatprep.subr.bf16.mxu0 0
        %331 = vmatpush1.bf16.xpose.msra.mxu0 0
        %332 = vmatprep.subr.bf16.mxu0 0
        %333 = vmatpush1.bf16.xpose.msra.mxu0 0
        %334 = vmatprep.subr.bf16.mxu0 0
        %335 = vmatpush1.bf16.xpose.msra.mxu0 0
        %336 = vmatprep.subr.bf16.mxu0 0
        %337 = vmatpush1.bf16.xpose.msra.mxu0 0
        %338 = vmatprep.subr.bf16.mxu0 0
        %339 = vmatpush1.bf16.xpose.msra.mxu0 0
        %340 = vmatprep.mubr.bf16.mxu0 0
        %341 = vmatmul.mubr.bf16.gmra.mrb[0].mxu0 %v304
        %v342 = vpop.f32.mrb[0].mxu0
        %v343 = vadd.f32 0.0, %v342
        %v344 = vpop.f32.mrb[0].mxu0
        %v345 = vpop.f32.mrb[0].mxu0
        %v346 = vadd.f32 0.0, %v345
        %v347 = vpop.f32.mrb[0].mxu0
        %348 = vmatprep.mubr.bf16.mxu0 0
        %349 = vmatmul.mubr.bf16.gmra.mrb[0].mxu0 %v305
        %v350 = vpop.f32.mrb[0].mxu0
        %v351 = vadd.f32 0.0, %v350
        %v352 = vpop.f32.mrb[0].mxu0
        %v353 = vpop.f32.mrb[0].mxu0
        %v354 = vadd.f32 0.0, %v353
        %v355 = vpop.f32.mrb[0].mxu0
        %356 = vdwg.mxu0
        %v357 = vadd.f32 %v292, %v343
        %v358 = vadd.f32 %v293, %v346
        %v359 = vadd.f32 %v294, %v351
        %v360 = vadd.f32 %v295, %v354
        %361 = vst.msk [vmem:[#allocation3] sm:$0xff] %vm287, %v357
        %362 = vst.msk [vmem:[#allocation3 + $0x8] sm:$0xff] %vm287, %v358
        %363 = vst.msk [vmem:[#allocation3 + $0x10] sm:$0xff] %vm287, %v359
        %364 = vst.msk [vmem:[#allocation3 + $0x18] sm:$0xff] %vm287, %v360
        // Predicated region
        $region33: #{pair_cov_var.1} parent=27 // pred_check
          %p365 = pneg %p197
        $region34: #{pair_cov_var.1} parent=27 // pred_check_branch
          %367 = sbr.rel (%p365) target = $region36
        $region35: #{pair_cov_var.1} parent=27 // pred_region
          %v368 = vlaneseq
          %v369 = vshrl.u32 %v368, 7
          %v370 = vadd.s32 %v369, 8
          %v371 = vadd.s32 %v369, 16
          %v372 = vadd.s32 %v369, 24
          %v373 = vlaneseq
          %v374 = vand.u32 %v373, 127
          %vm375 = vcmp.lt.s32.totalorder %v369, %v374
          %vm376 = vcmp.lt.s32.totalorder %v370, %v374
          %vm377 = vcmp.lt.s32.totalorder %v371, %v374
          %vm378 = vcmp.lt.s32.totalorder %v372, %v374
          %v379 = vsel %vm375, 1, 0
          %v380 = vsel %vm376, 1, 0
          %v381 = vsel %vm377, 1, 0
          %v382 = vsel %vm378, 1, 0
          %v383 = vcvt.s32.f32 %v379
          %v384 = vcvt.s32.f32 %v380
          %v385 = vcvt.s32.f32 %v381
          %v386 = vcvt.s32.f32 %v382
          %v387 = vld [vmem:[#allocation2] sm:$0xff]
          %v388 = vld [vmem:[#allocation2 + $0x8] sm:$0xff]
          %v389 = vld [vmem:[#allocation2 + $0x10] sm:$0xff]
          %v390 = vld [vmem:[#allocation2 + $0x18] sm:$0xff]
          %v391 = vld [vmem:[#allocation3] sm:$0xff]
          %v392 = vld [vmem:[#allocation3 + $0x8] sm:$0xff]
          %v393 = vld [vmem:[#allocation3 + $0x10] sm:$0xff]
          %v394 = vld [vmem:[#allocation3 + $0x18] sm:$0xff]
          %v395 = vsub.f32 %v387, %v391
          %v396 = vsub.f32 %v388, %v392
          %v397 = vsub.f32 %v389, %v393
          %v398 = vsub.f32 %v390, %v394
          %v399 = vmul.f32 %v383, 0.015873017
          %v400 = vmul.f32 %v384, 0.015873017
          %v401 = vmul.f32 %v385, 0.015873017
          %v402 = vmul.f32 %v386, 0.015873017
          %v403 = vmul.f32 %v395, %v399
          %v404 = vmul.f32 %v396, %v400
          %v405 = vmul.f32 %v397, %v401
          %v406 = vmul.f32 %v398, %v402
          %v407 = vmul.f32 %v403, 0.5
          %v408 = vmul.f32 %v404, 0.5
          %v409 = vmul.f32 %v405, 0.5
          %v410 = vmul.f32 %v406, 0.5
          %v411 = vmul.f32 %v407, %v403
          %v412 = vmul.f32 %v408, %v404
          %v413 = vmul.f32 %v409, %v405
          %v414 = vmul.f32 %v410, %v406
          %415 = vst.msk [vmem:[%s179] sm:$0xff] %vm287, %v411
          %416 = vst.msk [vmem:[%s179 + $0x8] sm:$0xff] %vm287, %v412
          %417 = vst.msk [vmem:[%s179 + $0x10] sm:$0xff] %vm287, %v413
          %418 = vst.msk [vmem:[%s179 + $0x18] sm:$0xff] %vm287, %v414
        $region36: #{pair_cov_var.1} parent=27 // pred_fallthru
          _
        %s419 = sand.u32 %s92, 1
        %s420 = scalar_lea.sflag [#allocation5], %s419
        %s421 = sand.u32 %s92, 1
        %s422 = smul.addr %s421, 32
        %s423 = scalar_lea.vmem [#allocation4], %s422
        // Predicated region
        $region37: #{pair_cov_var.1} parent=27 // pred_check
          %p424 = pneg %p102
        $region38: #{pair_cov_var.1} parent=27 // pred_check_branch
          %426 = sbr.rel (%p424) target = $region40
        $region39: #{pair_cov_var.1} parent=27 // pred_region
          %s428 = ssub.s32 512, 512
          %429 = vsyncadd %s420, %s428
          %s430 = smul.addr %s20, 4
          %s431 = smul.addr %s430, 128
          %s432 = scalar_lea.hbm %s2, %s431
          %s433 = sshll.u32 %s423, 4
          %s434 = int_to_ptr.vmem [resolvable:$true] %s433
          %439 = dma.vmem_to_hbm [thread:$0]  %s434, 512, %s432, %s420, 128, 128, 8
        $region40: #{pair_cov_var.1} parent=27 // pred_fallthru
          _
      $region28: #{pair_cov_var.1} parent=5 // pred_fallthru
        _
      %p440 = scmp.le.s32.totalorder 2, %s11
      // Predicated region
      $region41: #{pair_cov_var.1} parent=5 // pred_check
        %p441 = pneg %p440
      $region42: #{pair_cov_var.1} parent=5 // pred_check_branch
        %443 = sbr.rel (%p441) target = $region44
      $region43: #{pair_cov_var.1} parent=5 // pred_region
        %s444 = ssub.s32 %s11, 2
        // Predicated region
        $region45: #{pair_cov_var.1} parent=43 // pred_check
          %p445 = pneg %p108
        $region46: #{pair_cov_var.1} parent=43 // pred_check_branch
          %447 = sbr.rel (%p445) target = $region48
        $region47: #{pair_cov_var.1} parent=43 // pred_region
          %s448 = sand.u32 %s93, 1
          %s449 = scalar_lea.sflag [#allocation5], %s448
          %s450 = sand.u32 %s93, 1
          %s451 = smul.addr %s450, 32
          %s452 = scalar_lea.vmem [#allocation4], %s451
          %453 = dma.done %s449, 512
        $region48: #{pair_cov_var.1} parent=43 // pred_fallthru
          _
      $region44: #{pair_cov_var.1} parent=5 // pred_fallthru
        _
    $region6: #{pair_cov_var.1} parent=1 // loop_footer
      %s15 = sadd.s32 1, %s11
    $region7: #{pair_cov_var.1} parent=1 // loop_footer_branch
      %10 = sbr.rel target = $region3
    $region8: #{pair_cov_var.1} parent=1 // loop_exit
      _
    %454 = vsyncpa [#allocation5], 1
    %s455 = scalar_lea.sflag [#allocation5], 1
    %456 = vsyncpa %s455, 1

</llo_original>
